<compile_context>
chip_gen: v5e
topology: v5e:2x2
jax: 0.10.0
libtpu: 0.0.40
codegen_flags: <defaults>
</compile_context>

<pallas_src>
import math
from functools import partial

import jax
import jax.numpy as jnp
from jax import lax
from jax.experimental import pallas as pl
from jax.experimental.pallas import tpu as pltpu

LANES = 128                 # lane (fast) dimension of the 2-D view
DEFAULT_BLOCK_ROWS = 4096   # (4096, 128): 2 MiB f32 / 1 MiB bf16 per input block


def _wing_sum_kernel(o_ref, t_ref, out_ref, acc_ref, *,
                     width, curvature, c_const, block_rows, rows_valid,
                     blocks_per_part, mask_start, needs_mask, vreg_acc):
    """Accumulate the wing-loss sum for one partial-sum part of the grid.

    o_ref, t_ref : (block_rows, 128) VMEM tiles (native dtype)
    out_ref      : (1, 1) f32 SMEM partial-sum output for this grid part
    acc_ref      : (8, 128) f32 VMEM accumulator (one vreg), or
                   (block_rows, 128) when block_rows is not a multiple of 8.
    """
    j = pl.program_id(1)

    @pl.when(j == 0)
    def _():
        acc_ref[...] = jnp.zeros_like(acc_ref)

    # |t - o| in the native dtype (bf16 VPU on v6e/v7x); only d is upcast.
    d = jnp.abs(t_ref[...] - o_ref[...]).astype(jnp.float32)
    small = width * jnp.log1p(d * (1.0 / curvature))   # d < width branch (EUP)
    big = d - c_const                                  # d >= width branch
    loss = jnp.where(d < width, small, big)

    def _accumulate(x):
        if vreg_acc:
            # Fold the block into one vreg: pure VPU adds, no acc round-trip.
            acc_ref[...] += x.reshape(-1, 8, LANES).sum(axis=0)
        else:
            acc_ref[...] += x

    if needs_mask:
        gb = pl.program_id(0) * blocks_per_part + j    # global block index

        @pl.when(gb < mask_start)
        def _():
            _accumulate(loss)                           # full blocks: no mask cost

        @pl.when(gb >= mask_start)
        def _():
            # Partial last block and/or clamped overhang block: zero the rows
            # past `rows_valid` BEFORE they reach the accumulator.
            row0 = gb * block_rows
            ridx = lax.broadcasted_iota(jnp.int32, loss.shape, 0) + row0
            _accumulate(jnp.where(ridx < rows_valid, loss, 0.0))
    else:
        _accumulate(loss)

    @pl.when(j == pl.num_programs(1) - 1)
    def _():
        out_ref[0, 0] = jnp.sum(acc_ref[...])  # single final cross-lane reduce


def _wing_elementwise(o, t, width, curvature, c_const):
    d = jnp.abs(t - o).astype(jnp.float32)
    return jnp.where(d < width, width * jnp.log1p(d / curvature), d - c_const)


def wing_loss(outputs, targets, width=5.0, curvature=0.5, reduction="mean",
              block_rows=DEFAULT_BLOCK_ROWS):
    assert outputs.shape == targets.shape
    assert block_rows % 8 == 0, "block_rows must be a multiple of 8"
    width = float(width)
    curvature = float(curvature)
    c_const = width - width * math.log(1.0 + width / curvature)

    n_elems = outputs.size
    o_flat = outputs.reshape(-1)
    t_flat = targets.reshape(-1)

    # Bulk -> Pallas kernel on a lane-dense (rows, 128) view (free reshape when
    # n_elems % 128 == 0, the common case). Tiny (<128 elem) tail -> plain jnp.
    n_main = (n_elems // LANES) * LANES
    rows = n_main // LANES

    tail_sum = jnp.float32(0.0)
    if n_main < n_elems:
        # TODO(synk): for lane-unaligned sizes the [:n_main] slice costs one
        # extra HBM pass over the bulk; folding the ragged 128-lane tail into
        # the kernel's mask machinery (1-D blocks + flat-index mask) would
        # remove it. Lane-aligned inputs take the zero-copy path.
        tail_sum = jnp.sum(
            _wing_elementwise(o_flat[n_main:], t_flat[n_main:],
                              width, curvature, c_const))
        o_flat = o_flat[:n_main]
        t_flat = t_flat[:n_main]

    if rows == 0:
        total = tail_sum
    else:
        o2 = o_flat.reshape(rows, LANES)
        t2 = t_flat.reshape(rows, LANES)

        # Block rows: full extent when small (always legal), else block_rows.
        blk = rows if rows <= block_rows else block_rows
        n_blocks = -(-rows // blk)
        # Unconditional 2-way split whenever there are >= 2 blocks, so v7x's
        # two TensorCores each get their own partial sum; odd block counts get
        # a clamped, fully-masked overhang block.
        num_parts = 2 if n_blocks >= 2 else 1
        blocks_per_part = -(-n_blocks // num_parts)
        total_blocks = num_parts * blocks_per_part
        last_partial = (rows % blk) != 0
        needs_mask = last_partial or (total_blocks != n_blocks)
        mask_start = (n_blocks - 1) if last_partial else n_blocks
        vreg_acc = (blk % 8) == 0
        acc_shape = (8, LANES) if vreg_acc else (blk, LANES)

        kernel = partial(
            _wing_sum_kernel,
            width=width, curvature=curvature, c_const=c_const,
            block_rows=blk, rows_valid=rows,
            blocks_per_part=blocks_per_part, mask_start=mask_start,
            needs_mask=needs_mask, vreg_acc=vreg_acc,
        )

        if total_blocks == n_blocks:
            def in_map(i, j):
                return (i * blocks_per_part + j, 0)
        else:
            def in_map(i, j):   # clamp the overhang block back in bounds
                return (jnp.minimum(i * blocks_per_part + j, n_blocks - 1), 0)

        itemsize = jnp.dtype(o2.dtype).itemsize
        cost = pl.CostEstimate(
            flops=8 * rows * LANES,
            transcendentals=rows * LANES,
            bytes_accessed=2 * rows * LANES * itemsize + 4 * num_parts,
        )

        partials = pl.pallas_call(
            kernel,
            out_shape=jax.ShapeDtypeStruct((num_parts, 1), jnp.float32),
            grid_spec=pltpu.PrefetchScalarGridSpec(
                num_scalar_prefetch=0,
                grid=(num_parts, blocks_per_part),
                in_specs=[
                    pl.BlockSpec((blk, LANES), in_map),
                    pl.BlockSpec((blk, LANES), in_map),
                ],
                out_specs=pl.BlockSpec(
                    (1, 1), lambda i, j: (i, 0), memory_space=pltpu.SMEM
                ),
                scratch_shapes=[pltpu.VMEM(acc_shape, jnp.float32)],
            ),
            compiler_params=pltpu.CompilerParams(
                dimension_semantics=("parallel", "arbitrary"),
                vmem_limit_bytes=32 * 1024 * 1024,
            ),
            cost_estimate=cost,
        )(o2, t2)

        total = jnp.sum(partials) + tail_sum

    if reduction == "sum":
        return total
    if reduction == "mean":
        return total / jnp.float32(n_elems)
    # TODO(synk): reduction="none" (per-element loss tensor) is not implemented;
    # only "sum"/"mean" (module default is "mean").
    raise ValueError(f"unsupported reduction: {reduction}")


class WingLoss:
    """JAX/Pallas counterpart of catalyst WingLoss (forward only)."""

    def __init__(self, width: int = 5, curvature: float = 0.5, reduction: str = "mean"):
        self.loss_fn = partial(
            wing_loss, width=float(width), curvature=float(curvature),
            reduction=reduction)

    def __call__(self, outputs, targets):
        return self.loss_fn(outputs, targets)


def _reference_wing_loss(outputs, targets, width=5.0, curvature=0.5):
    # |t - o| in native dtype (matches torch semantics for bf16), math in f32.
    d = jnp.abs(targets - outputs).astype(jnp.float32)
    c = width - width * math.log(1.0 + width / curvature)
    loss = jnp.where(d < width, width * jnp.log1p(d / curvature), d - c)
    return jnp.mean(loss)


def _check(outputs, targets, rtol=1e-4, atol=1e-6):
    module = WingLoss(width=5, curvature=0.5, reduction="mean")
    got = jax.block_until_ready(module(outputs, targets))
    ref = _reference_wing_loss(outputs, targets)
    assert jnp.allclose(got, ref, rtol=rtol, atol=atol), (got, ref)
    return got


if __name__ == "__main__":
    key = jax.random.PRNGKey(0)
    k1, k2 = jax.random.split(key)

    # Primary small example consistent with a landmark-regression tensor.
    shape = (2, 4, 16, 16)
    outputs = jax.random.normal(k1, shape, dtype=jnp.float32) * 4.0
    targets = jax.random.normal(k2, shape, dtype=jnp.float32) * 4.0
    _check(outputs, targets, rtol=1e-5, atol=1e-5)

    # Native-dtype path (bf16 sub/abs in-kernel, no wrapper upcast).
    _check(outputs.astype(jnp.bfloat16), targets.astype(jnp.bfloat16))

    # Lane-unaligned tail path (n not a multiple of 128).
    o_t = jax.random.normal(k1, (3, 7, 11), dtype=jnp.float32) * 4.0
    t_t = jax.random.normal(k2, (3, 7, 11), dtype=jnp.float32) * 4.0
    _check(o_t, t_t)

    # Partial-last-block + 2-part split: rows=5120 -> 2 blocks (4096 + 1024).
    o_m = jax.random.normal(k1, (5120, 128), dtype=jnp.float32) * 4.0
    t_m = jax.random.normal(k2, (5120, 128), dtype=jnp.float32) * 4.0
    _check(o_m, t_m)

    # Even 2-part split, no masking: rows=8192 -> 2 full blocks.
    o_p = jax.random.normal(k1, (8192, 128), dtype=jnp.float32) * 4.0
    t_p = jax.random.normal(k2, (8192, 128), dtype=jnp.float32) * 4.0
    _check(o_p, t_p)

    # Odd block count + partial last block + clamped overhang block:
    # rows=8292 -> 3 blocks (4096, 4096, 100), 2 parts of 2 grid steps.
    o_o = jax.random.normal(k1, (8292, 128), dtype=jnp.float32) * 4.0
    t_o = jax.random.normal(k2, (8292, 128), dtype=jnp.float32) * 4.0
    _check(o_o, t_o)

    print("KERNEL_OK")
</pallas_src>

<mosaic_0001>
module attributes {stable_mosaic.version = 11 : i64} {
  func.func @_wing_sum_kernel(%arg0: i32, %arg1: i32, %arg2: memref<16x128xf32, #tpu.memory_space<vmem>>, %arg3: memref<16x128xf32, #tpu.memory_space<vmem>>, %arg4: memref<1x1xf32, #tpu.memory_space<smem>>, %arg5: memref<8x128xf32, #tpu.memory_space<vmem>>) attributes {dimension_semantics = [#tpu.dimension_semantics<parallel>, #tpu.dimension_semantics<arbitrary>], iteration_bounds = array<i64: 1, 1>, scalar_prefetch = 0 : i64, scratch_operands = 1 : i64, tpu.core_type = #tpu.core_type<tc>, window_params = [{transform_indices = @transform_0, window_bounds = array<i64: 16, 128>}, {transform_indices = @transform_1, window_bounds = array<i64: 16, 128>}, {transform_indices = @transform_2, window_bounds = array<i64: 1, 1>}]} {
    %c0_i32 = arith.constant 0 : i32
    %0 = arith.cmpi eq, %arg1, %c0_i32 : i32
    %1 = arith.extui %0 : i1 to i32
    %c0_i32_0 = arith.constant 0 : i32
    %2 = arith.cmpi ne, %1, %c0_i32_0 : i32
    scf.if %2 {
      %cst_14 = arith.constant 0.000000e+00 : f32
      %25 = vector.broadcast %cst_14 : f32 to vector<8x128xf32>
      %c0_15 = arith.constant 0 : index
      %c0_16 = arith.constant 0 : index
      %26 = vector.load %arg5[%c0_15, %c0_16] : memref<8x128xf32, #tpu.memory_space<vmem>>, vector<8x128xf32>
      tpu.vector_store %arg5[%c0_15, %c0_16], %25 {strides = array<i32>} : memref<8x128xf32, #tpu.memory_space<vmem>>, vector<8x128xf32>,
    } else {
    }
    %c0 = arith.constant 0 : index
    %c0_1 = arith.constant 0 : index
    %3 = vector.load %arg3[%c0, %c0_1] : memref<16x128xf32, #tpu.memory_space<vmem>>, vector<16x128xf32>
    %c0_2 = arith.constant 0 : index
    %c0_3 = arith.constant 0 : index
    %4 = vector.load %arg2[%c0_2, %c0_3] : memref<16x128xf32, #tpu.memory_space<vmem>>, vector<16x128xf32>
    %5 = arith.subf %3, %4 : vector<16x128xf32>
    %6 = math.absf %5 : vector<16x128xf32>
    %cst = arith.constant 2.000000e+00 : f32
    %7 = vector.broadcast %cst : f32 to vector<16x128xf32>
    %8 = arith.mulf %6, %7 : vector<16x128xf32>
    %9 = math.log1p %8 : vector<16x128xf32>
    %cst_4 = arith.constant 5.000000e+00 : f32
    %10 = vector.broadcast %cst_4 : f32 to vector<16x128xf32>
    %11 = arith.mulf %10, %9 : vector<16x128xf32>
    %cst_5 = arith.constant -6.9894762 : f32
    %12 = vector.broadcast %cst_5 : f32 to vector<16x128xf32>
    %13 = arith.subf %6, %12 : vector<16x128xf32>
    %cst_6 = arith.constant 5.000000e+00 : f32
    %14 = vector.broadcast %cst_6 : f32 to vector<16x128xf32>
    %15 = arith.cmpf olt, %6, %14 : vector<16x128xf32>
    %16 = arith.select %15, %11, %13 : vector<16x128xi1>, vector<16x128xf32>
    %c0_7 = arith.constant 0 : index
    %c0_8 = arith.constant 0 : index
    %17 = vector.load %arg5[%c0_7, %c0_8] : memref<8x128xf32, #tpu.memory_space<vmem>>, vector<8x128xf32>
    %18 = vector.shape_cast %16 : vector<16x128xf32> to vector<2x8x128xf32>
    %cst_9 = arith.constant dense<0.000000e+00> : vector<8x128xf32>
    %19 = vector.multi_reduction <add>, %18, %cst_9 [0] : vector<2x8x128xf32> to vector<8x128xf32>
    %20 = arith.addf %17, %19 : vector<8x128xf32>
    %c0_10 = arith.constant 0 : index
    %c0_11 = arith.constant 0 : index
    %21 = vector.load %arg5[%c0_10, %c0_11] : memref<8x128xf32, #tpu.memory_space<vmem>>, vector<8x128xf32>
    tpu.vector_store %arg5[%c0_10, %c0_11], %20 {strides = array<i32>} : memref<8x128xf32, #tpu.memory_space<vmem>>, vector<8x128xf32>,
    %c0_i32_12 = arith.constant 0 : i32
    %22 = arith.cmpi eq, %arg1, %c0_i32_12 : i32
    %23 = arith.extui %22 : i1 to i32
    %c0_i32_13 = arith.constant 0 : i32
    %24 = arith.cmpi ne, %23, %c0_i32_13 : i32
    scf.if %24 {
      %c0_14 = arith.constant 0 : index
      %c0_15 = arith.constant 0 : index
      %25 = vector.load %arg5[%c0_14, %c0_15] : memref<8x128xf32, #tpu.memory_space<vmem>>, vector<8x128xf32>
      %26 = vector.shape_cast %25 : vector<8x128xf32> to vector<1x8x128xf32>
      %cst_16 = arith.constant dense<0.000000e+00> : vector<1xf32>
      %27 = vector.multi_reduction <add>, %26, %cst_16 [1, 2] : vector<1x8x128xf32> to vector<1xf32>
      %28 = vector.shape_cast %27 : vector<1xf32> to vector<1x1x1xf32>
      %29 = vector.extract %28[0, 0, 0] : f32 from vector<1x1x1xf32>
      %c0_17 = arith.constant 0 : index
      %c0_18 = arith.constant 0 : index
      %30 = memref.load %arg4[%c0_17, %c0_18] : memref<1x1xf32, #tpu.memory_space<smem>>
      memref.store %29, %arg4[%c0_17, %c0_18] : memref<1x1xf32, #tpu.memory_space<smem>>
    } else {
    }
    return
  }
  func.func @transform_0(%arg0: i32, %arg1: i32) -> (i32, i32) {
    %c1_i32 = arith.constant 1 : i32
    %0 = arith.muli %arg0, %c1_i32 : i32
    %1 = arith.addi %0, %arg1 : i32
    %c0_i32 = arith.constant 0 : i32
    %c0_i32_0 = arith.constant 0 : i32
    return %1, %c0_i32 : i32, i32
  }
  func.func @transform_1(%arg0: i32, %arg1: i32) -> (i32, i32) {
    %c1_i32 = arith.constant 1 : i32
    %0 = arith.muli %arg0, %c1_i32 : i32
    %1 = arith.addi %0, %arg1 : i32
    %c0_i32 = arith.constant 0 : i32
    %c0_i32_0 = arith.constant 0 : i32
    return %1, %c0_i32 : i32, i32
  }
  func.func @transform_2(%arg0: i32, %arg1: i32) -> (i32, i32) {
    %c0_i32 = arith.constant 0 : i32
    %c0_i32_0 = arith.constant 0 : i32
    return %arg0, %c0_i32 : i32, i32
  }
}

</mosaic_0001>

<llo_original>
// kernel: tpu_custom_call.1
$region0: #{tpu_custom_call.1}
  #allocation0 [shape = 'u32[]', space=smem, size = 0x4, offset = 0x4, fixed_abs, tag = 'smem constant byte address 0x4 - core index']
  #allocation1 [shape = 'u32[72,128]{1,0:T(1,128)}', space=vmem, size = 0x9000, scoped, tag = 'internal scratch']
  #allocation2 [shape = 'f32[8,128]{1,0:T(8,128)}', space=vmem, size = 0x1000, scoped, tag = 'scratch operand']
  %s0 = inlined_call_operand.hbm [shape: f32[16,128], index: 0, kind: input, shape index: {}]
  %s1 = inlined_call_operand.hbm [shape: f32[16,128], index: 1, kind: input, shape index: {}]
  %s2 = inlined_call_operand.hbm [shape: f32[1,1], index: 2, kind: output, shape index: {}]
  %s3 = sld [smem:[#allocation0]]
  $region34: #{tpu_custom_call.1} parent=0
    _
  %s5 = ssub.s32 1, %s3
  %s6 = scalar_select 0, %s5, %s3
  $region1: #{tpu_custom_call.1} parent=0
    #allocation3 [shape = 'u8[8192]{0}', space=vmem, size = 0x2000, scoped, tag = 'input window, operand 0, single buffered']
    #allocation4 [shape = 's32[1]{0}', space=sflag, size = 0x4, scoped, tag = 'scoped memory for tpu_custom_call.1']
    #allocation5 [shape = 's32[1]{0}', space=sflag, size = 0x4, scoped, tag = 'scoped memory for tpu_custom_call.1']
    #allocation6 [shape = 'u8[8192]{0}', space=vmem, size = 0x2000, scoped, tag = 'input window, operand 1, single buffered']
    #allocation7 [shape = 's32[1]{0}', space=sflag, size = 0x4, scoped, tag = 'scoped memory for tpu_custom_call.1']
    #allocation8 [shape = 'u8[512]{0}', space=smem, size = 0x200, scoped, tag = 'output window, operand 0, single buffered']
    %7 = vsyncpa [#allocation4], 0
    %8 = vsyncpa [#allocation7], 0
    %9 = vsyncpa [#allocation5], 0
    // Predicated region
    $region2: #{tpu_custom_call.1} parent=1 // pred_check
      _
    $region3: #{tpu_custom_call.1} parent=1 // pred_check_branch
      %11 = sbr.rel (0) target = $region5
    $region4: #{tpu_custom_call.1} parent=1 // pred_region
      %s12 = sadd.s32 0, 0
      %s13 = smul.u32 2, %s12
      %15 = vsyncadd [#allocation4], 0
      %s16 = smul.addr %s13, 8
      %s17 = scalar_lea.hbm %s0, %s16
      %s18 = sshll.u32 %s17, 4
      %s19 = int_to_ptr.hbm [resolvable:$true] %s18
      %s20 = sshll.u32 [#allocation3], 4
      %s21 = int_to_ptr.vmem [resolvable:$true] %s20
      %26 = dma.hbm_to_vmem [thread:$0]  %s19, 256, %s21, [#allocation4], 128, 128, 8
    $region5: #{tpu_custom_call.1} parent=1 // pred_fallthru
      _
    // Predicated region
    $region6: #{tpu_custom_call.1} parent=1 // pred_check
      _
    $region7: #{tpu_custom_call.1} parent=1 // pred_check_branch
      %28 = sbr.rel (0) target = $region9
    $region8: #{tpu_custom_call.1} parent=1 // pred_region
      %s29 = sadd.s32 0, 0
      %s30 = smul.u32 2, %s29
      %32 = vsyncadd [#allocation7], 0
      %s33 = smul.addr %s30, 8
      %s34 = scalar_lea.hbm %s1, %s33
      %s35 = sshll.u32 %s34, 4
      %s36 = int_to_ptr.hbm [resolvable:$true] %s35
      %s37 = sshll.u32 [#allocation6], 4
      %s38 = int_to_ptr.vmem [resolvable:$true] %s37
      %43 = dma.hbm_to_vmem [thread:$0]  %s36, 256, %s38, [#allocation7], 128, 128, 8
    $region9: #{tpu_custom_call.1} parent=1 // pred_fallthru
      _
    // Predicated region
    $region10: #{tpu_custom_call.1} parent=1 // pred_check
      _
    $region11: #{tpu_custom_call.1} parent=1 // pred_check_branch
      %45 = sbr.rel (0) target = $region13
    $region12: #{tpu_custom_call.1} parent=1 // pred_region
      %47 = dma.done [#allocation4], 256
    $region13: #{tpu_custom_call.1} parent=1 // pred_fallthru
      _
    // Predicated region
    $region14: #{tpu_custom_call.1} parent=1 // pred_check
      _
    $region15: #{tpu_custom_call.1} parent=1 // pred_check_branch
      %49 = sbr.rel (0) target = $region17
    $region16: #{tpu_custom_call.1} parent=1 // pred_region
      %51 = dma.done [#allocation7], 256
    $region17: #{tpu_custom_call.1} parent=1 // pred_fallthru
      _
    %s52 = sadd.s32 0, 0
    %s53 = smul.u32 2, %s52
    %s54 = sadd.s32 0, 0
    %s55 = smul.u32 2, %s54
    %p56 = scmp.eq.s32.totalorder 0, 0
    // Predicated region
    $region18: #{tpu_custom_call.1} parent=1 // pred_check
      %p57 = pneg %p56
    $region19: #{tpu_custom_call.1} parent=1 // pred_check_branch
      %59 = sbr.rel (%p57) target = $region21
    $region20: #{tpu_custom_call.1} parent=1 // pred_region
      %60 = vst [vmem:[#allocation2] sm:$0xff] 0.0
    $region21: #{tpu_custom_call.1} parent=1 // pred_fallthru
      _
    %v61 = vld [vmem:[#allocation6] sm:$0xff]
    %v62 = vld [vmem:[#allocation6 + $0x8] sm:$0xff]
    %v63 = vld [vmem:[#allocation3] sm:$0xff]
    %v64 = vld [vmem:[#allocation3 + $0x8] sm:$0xff]
    %v65 = vsub.f32 %v61, %v63
    %v66 = vsub.f32 %v62, %v64
    %v67 = vand.u32 2147483647, %v65
    %v68 = vand.u32 2147483647, %v66
    %v69 = vmul.f32 %v67, 2.0
    %v70 = vmul.f32 %v68, 2.0
    %v71 = vadd.f32 %v69, 1.0
    %v72 = vlog2.pop %v71
    %v73 = vmul.f32 %v72, 0.6931472
    %v74 = vmul.f32 -0.5, %v69
    %v75 = vadd.f32 %v74, 1.0
    %v76 = vmul.f32 %v75, %v69
    %v77 = vand.u32 2147483647, %v69
    %vm78 = vcmp.lt.f32.partialorder %v77, 0.0004427343
    %v79 = vsel %vm78, %v76, %v73
    %v80 = vadd.f32 %v70, 1.0
    %v81 = vlog2.pop %v80
    %v82 = vmul.f32 %v81, 0.6931472
    %v83 = vmul.f32 -0.5, %v70
    %v84 = vadd.f32 %v83, 1.0
    %v85 = vmul.f32 %v84, %v70
    %v86 = vand.u32 2147483647, %v70
    %vm87 = vcmp.lt.f32.partialorder %v86, 0.0004427343
    %v88 = vsel %vm87, %v85, %v82
    %v89 = vmul.f32 %v79, 5.0
    %v90 = vmul.f32 %v88, 5.0
    %v91 = vsub.f32 %v67, -6.989476
    %v92 = vsub.f32 %v68, -6.989476
    %vm93 = vcmp.lt.f32.partialorder %v67, 5.0
    %vm94 = vcmp.lt.f32.partialorder %v68, 5.0
    %v95 = vsel %vm93, %v89, %v91
    %v96 = vsel %vm94, %v90, %v92
    %v97 = vld [vmem:[#allocation2] sm:$0xff]
    %v98 = vadd.f32 %v95, %v96
    %v99 = vadd.f32 %v97, %v98
    %100 = vst [vmem:[#allocation2] sm:$0xff] %v99
    // Predicated region
    $region22: #{tpu_custom_call.1} parent=1 // pred_check
      %p101 = pneg %p56
    $region23: #{tpu_custom_call.1} parent=1 // pred_check_branch
      %103 = sbr.rel (%p101) target = $region25
    $region24: #{tpu_custom_call.1} parent=1 // pred_region
      %v104 = vld [vmem:[#allocation2] sm:$0xff]
      %105 = vadd.xlane.f32.xlu0 %v104
      %v106 = vpop.xlane.xlu0 %105
      %v107 = vrot.slane %v106, 4
      %v108 = vadd.f32 %v106, %v107
      %v109 = vrot.slane %v108, 2
      %v110 = vadd.f32 %v108, %v109
      %v111 = vrot.slane %v110, 1
      %v112 = vadd.f32 %v110, %v111
      %s113 = vtos %v112
      %s114 = scalar_lea.smem [#allocation8], 0
      %115 = sst [smem:[%s114]] %s113
    $region25: #{tpu_custom_call.1} parent=1 // pred_fallthru
      _
    // Predicated region
    $region26: #{tpu_custom_call.1} parent=1 // pred_check
      _
    $region27: #{tpu_custom_call.1} parent=1 // pred_check_branch
      %117 = sbr.rel (0) target = $region29
    $region28: #{tpu_custom_call.1} parent=1 // pred_region
      %119 = vsyncadd [#allocation5], 0
      %s121 = sshll.u32 %s2, 4
      %s122 = int_to_ptr.hbm [resolvable:$true] %s121
      %124 = dma.smem_to_hbm [#allocation8], 16, %s122, [#allocation5]
    $region29: #{tpu_custom_call.1} parent=1 // pred_fallthru
      _
    // Predicated region
    $region30: #{tpu_custom_call.1} parent=1 // pred_check
      _
    $region31: #{tpu_custom_call.1} parent=1 // pred_check_branch
      %126 = sbr.rel (0) target = $region33
    $region32: #{tpu_custom_call.1} parent=1 // pred_region
      %128 = dma.done [#allocation5], 16
    $region33: #{tpu_custom_call.1} parent=1 // pred_fallthru
      _
    %129 = sfence
    %130 = vsyncpa [#allocation4], 1
    %131 = vsyncpa [#allocation7], 1
    %132 = vsyncpa [#allocation5], 1

</llo_original>
